<compile_context>
chip_gen: v7x
topology: tpu7x:2x2x1
jax: 0.10.0
libtpu: 0.0.40
codegen_flags: <defaults>
</compile_context>

<pallas_src>
import functools

import jax
import jax.numpy as jnp
from jax.experimental import pallas as pl
from jax.experimental.pallas import tpu as pltpu


# --------------------------------------------------------------------------- helpers

def _round_up(x, m):
    return (x + m - 1) // m * m


def _vmem_budget_bytes():
    """Per-generation VMEM budget (leave headroom for compiler temps)."""
    try:
        cap = int(pltpu.get_tpu_info().vmem_capacity_bytes)
    except Exception:
        cap = 64 * 1024 * 1024          # conservative: v7x physical VMEM / core
    return (cap * 3) // 4               # ~48 MiB on v7x, ~96 MiB on v5e/v6e


def _choose_row_tile(hw, k16, cout, in_esize, vmem_budget):
    """Largest lane-aligned (multiple-of-128) HW row tile fitting ~half the budget."""
    # kernel 1 residency per output row: double-buffered patch block,
    # double-buffered y block (f32-ish), ~2 live f32 temps of the tile.
    per_row = 2 * k16 * in_esize + 4 * cout * 4
    fixed = k16 * cout * in_esize                     # single-buffered weight
    t = (vmem_budget // 2 - fixed) // max(per_row, 1)
    t = max(128, min((t // 128) * 128, 8192, _round_up(hw, 128)))
    ht = -(-hw // t)                                  # rebalance to cut padding waste
    return _round_up(-(-hw // ht), 128)


def _single_buffered_spec(block_shape, index_map):
    """Grid-invariant operand: don't hold two VMEM copies (perf review)."""
    try:
        return pl.BlockSpec(block_shape, index_map,
                            pipeline_mode=pl.Buffered(buffer_count=1))
    except Exception:                                  # older jax w/o pipeline_mode
        return pl.BlockSpec(block_shape, index_map)


# --------------------------------------------------------------------------- kernels

def _conv_stats_kernel(p_ref, w_ref, y_ref, s1_ref, s2_ref, *, channel_major):
    """Conv(4x4, s=2, p=1, no bias) tile as ONE MXU matmul + per-tile channel sums.

    p_ref:  (1, T, 16*Cin)   im2col patch rows (input dtype; zero rows in the pad)
    w_ref:  (16*Cin, Cout)   conv weight, single-buffered (grid-invariant)
    y_ref:  (1, Cout, T) if channel_major else (1, T, Cout)   conv output tile
    s1/s2:  (1, 1, 1, Cout)  per-tile sum / sum-of-squares (f32); padded rows are
                             exact zeros (no bias), so they contribute nothing.
    """
    y = jnp.dot(p_ref[0], w_ref[...], preferred_element_type=jnp.float32)  # (T, Cout)
    s1_ref[0, 0] = jnp.sum(y, axis=0, keepdims=True)
    s2_ref[0, 0] = jnp.sum(y * y, axis=0, keepdims=True)
    yo = y.astype(y_ref.dtype)
    y_ref[0] = yo.T if channel_major else yo


def _norm_act_kernel(y_ref, scale_ref, bias_ref, o_ref, *, negative_slope):
    """GroupNorm affine folded into (scale, bias): 2 broadcast passes + LeakyReLU."""
    z = y_ref[0].astype(jnp.float32) * scale_ref[0] + bias_ref[0]
    o_ref[0] = jnp.where(z >= 0.0, z, negative_slope * z).astype(o_ref.dtype)


# --------------------------------------------------------------------------- wrapper

def downblock_forward(x_nchw, w_hwio, gamma, beta, *, num_groups=4, eps=1e-5,
                      negative_slope=0.2):
    """x_nchw: (B, Cin, H, W); w_hwio: (4, 4, Cin, Cout); gamma/beta: (Cout,)."""
    B, Cin, H, W = x_nchw.shape
    KH, KW, wcin, Cout = w_hwio.shape
    assert (KH, KW) == (4, 4) and wcin == Cin
    assert Cout % num_groups == 0, "GroupNorm(4) requires out_planes % 4 == 0"
    Ho = (H - 2) // 2 + 1          # Conv2d(k=4, s=2, p=1) output size (odd H/W ok)
    Wo = (W - 2) // 2 + 1
    HW = Ho * Wo
    K16 = 16 * Cin
    in_dtype = x_nchw.dtype
    esize = jnp.dtype(in_dtype).itemsize

    vmem_budget = _vmem_budget_bytes()
    T = _choose_row_tile(HW, K16, Cout, esize, vmem_budget)
    HWp = _round_up(HW, T)
    HT = HWp // T
    channel_major = Cout < 128      # lane-dense stores matter more than the transpose

    # ---- im2col pre-pass (XLA): patches[b, ho*Wo+wo, (ky*4+kx)*Cin+ci] ---------
    # TODO(synk): this patch slab is ~4x the input in HBM; for large Cin switch to
    # 4 accumulated K=4*Cin dots over a space-to-depth slab with manual halo DMA.
    xt = jnp.transpose(x_nchw, (0, 2, 3, 1))                    # (B, H, W, Cin)
    xp = jnp.pad(xt, ((0, 0), (1, 1), (1, 1), (0, 0)))          # zero pad = 1
    cols = [xp[:, ky:ky + 2 * Ho - 1:2, kx:kx + 2 * Wo - 1:2, :]
            for ky in range(4) for kx in range(4)]              # 16 x (B, Ho, Wo, Cin)
    patches = jnp.stack(cols, axis=3).reshape(B, HW, K16)
    if HWp != HW:
        patches = jnp.pad(patches, ((0, 0), (0, HWp - HW), (0, 0)))
    # TODO(synk): for tiny first-layer Cin (3/4) pad K16/Cout to 256-multiples so
    # the v6e/v7x 2x256^2 MXU and input vregs are not mostly padding.
    w_flat = w_hwio.reshape(K16, Cout).astype(in_dtype)         # bf16 stays bf16

    if channel_major:
        y_shape = (B, Cout, HWp)
        y_spec = pl.BlockSpec((1, Cout, T), lambda b, t: (b, 0, t))
    else:
        y_shape = (B, HWp, Cout)
        y_spec = pl.BlockSpec((1, T, Cout), lambda b, t: (b, t, 0))
    stat_spec = pl.BlockSpec((1, 1, 1, Cout), lambda b, t: (b, t, 0, 0))
    cparams = pltpu.CompilerParams(
        dimension_semantics=("parallel", "parallel"),
        vmem_limit_bytes=vmem_budget)

    # ---- pass 1: conv + per-tile channel stats --------------------------------
    y, s1, s2 = pl.pallas_call(
        functools.partial(_conv_stats_kernel, channel_major=channel_major),
        grid=(B, HT),
        in_specs=[
            pl.BlockSpec((1, T, K16), lambda b, t: (b, t, 0)),
            _single_buffered_spec((K16, Cout), lambda b, t: (0, 0)),
        ],
        out_specs=(y_spec, stat_spec, stat_spec),
        out_shape=(jax.ShapeDtypeStruct(y_shape, in_dtype),
                   jax.ShapeDtypeStruct((B, HT, 1, Cout), jnp.float32),
                   jax.ShapeDtypeStruct((B, HT, 1, Cout), jnp.float32)),
        compiler_params=cparams,
    )(patches, w_flat)

    # ---- GroupNorm stats -> folded per-channel scale/bias (tiny XLA math) -----
    s1 = jnp.sum(s1, axis=(1, 2))                           # (B, Cout), f32
    s2 = jnp.sum(s2, axis=(1, 2))
    Cg = Cout // num_groups
    n = float(HW * Cg)
    g1 = s1.reshape(B, num_groups, Cg).sum(-1) / n          # group mean
    g2 = s2.reshape(B, num_groups, Cg).sum(-1) / n          # group E[x^2]
    var = jnp.maximum(g2 - g1 * g1, 0.0)                    # clamp (catastrophic cancel)
    inv = jax.lax.rsqrt(var + eps)                          # (B, G)
    mean_c = jnp.repeat(g1, Cg, axis=1)                     # (B, Cout)
    inv_c = jnp.repeat(inv, Cg, axis=1)
    scale = inv_c * gamma[None, :].astype(jnp.float32)      # y*scale + bias ==
    bias = beta[None, :].astype(jnp.float32) - mean_c * scale   # gamma*(y-m)*istd + beta

    if channel_major:
        scale = scale.reshape(B, Cout, 1)
        bias = bias.reshape(B, Cout, 1)
        sb_spec = pl.BlockSpec((1, Cout, 1), lambda b, t: (b, 0, 0))
        o_shape = (B, Cout, HWp)
        o_spec = pl.BlockSpec((1, Cout, T), lambda b, t: (b, 0, t))
    else:
        scale = scale.reshape(B, 1, Cout)
        bias = bias.reshape(B, 1, Cout)
        sb_spec = pl.BlockSpec((1, 1, Cout), lambda b, t: (b, 0, 0))
        o_shape = (B, HWp, Cout)
        o_spec = pl.BlockSpec((1, T, Cout), lambda b, t: (b, t, 0))

    # ---- pass 2: normalize + LeakyReLU -----------------------------------------
    out = pl.pallas_call(
        functools.partial(_norm_act_kernel, negative_slope=negative_slope),
        grid=(B, HT),
        in_specs=[y_spec, sb_spec, sb_spec],
        out_specs=o_spec,
        out_shape=jax.ShapeDtypeStruct(o_shape, in_dtype),
        compiler_params=cparams,
    )(y, scale, bias)

    if channel_major:
        return out[:, :, :HW].reshape(B, Cout, Ho, Wo)           # free reshape
    out = out[:, :HW, :].reshape(B, Ho, Wo, Cout)
    return jnp.transpose(out, (0, 3, 1, 2))                      # one XLA permute


# --------------------------------------------------------------------------- init

def spectral_normalize(w, iters=30):
    # TODO(synk): torch's spectral_norm keeps a persistent power-iteration state
    # updated every forward; here we apply a deterministic one-shot division by
    # the leading singular value (same reparameterization, applied at init).
    mat = w.reshape(-1, w.shape[-1]).T
    u = jnp.full((mat.shape[0],), 1.0 / jnp.sqrt(mat.shape[0]), w.dtype)
    v = None
    for _ in range(iters):
        v = mat.T @ u
        v = v / (jnp.linalg.norm(v) + 1e-12)
        u = mat @ v
        u = u / (jnp.linalg.norm(u) + 1e-12)
    sigma = u @ (mat @ v)
    return w / sigma


# --------------------------------------------------------------------------- reference

def _reference(x_nchw, w_hwio, gamma, beta):
    y = jax.lax.conv_general_dilated(
        x_nchw, w_hwio, window_strides=(2, 2), padding=((1, 1), (1, 1)),
        dimension_numbers=('NCHW', 'HWIO', 'NCHW'))
    B, C, Ho, Wo = y.shape
    G = 4
    yg = y.reshape(B, G, C // G, Ho, Wo)
    m = yg.mean(axis=(2, 3, 4), keepdims=True)
    v = jnp.mean((yg - m) ** 2, axis=(2, 3, 4), keepdims=True)
    yn = ((yg - m) / jnp.sqrt(v + 1e-5)).reshape(B, C, Ho, Wo)
    yn = yn * gamma.reshape(1, C, 1, 1) + beta.reshape(1, C, 1, 1)
    return jnp.where(yn >= 0, yn, 0.2 * yn)


# --------------------------------------------------------------------------- main

if __name__ == "__main__":
    def run_case(key, B, Cin, Cout, H, W):
        kx, kw, kg, kb = jax.random.split(key, 4)
        x = jax.random.normal(kx, (B, Cin, H, W), jnp.float32)
        w_hwio = spectral_normalize(
            jax.random.normal(kw, (4, 4, Cin, Cout), jnp.float32) * 0.1)
        gamma = 1.0 + 0.1 * jax.random.normal(kg, (Cout,), jnp.float32)
        beta = 0.1 * jax.random.normal(kb, (Cout,), jnp.float32)

        out = jax.block_until_ready(jax.jit(downblock_forward)(x, w_hwio, gamma, beta))
        assert out.shape == (B, Cout, H // 2, W // 2), out.shape
        assert bool(jnp.all(jnp.isfinite(out)))
        ref = _reference(x, w_hwio, gamma, beta)
        err = float(jnp.max(jnp.abs(out - ref)))
        assert err < 2e-3, f"max abs err vs reference: {err}"

    k1, k2 = jax.random.split(jax.random.PRNGKey(0))
    run_case(k1, B=2, Cin=4, Cout=8, H=16, W=16)     # channel-major output path
    run_case(k2, B=1, Cin=8, Cout=128, H=16, W=16)   # NHWC lane-dense output path
    print("KERNEL_OK")
</pallas_src>

<mosaic_0001>
module attributes {stable_mosaic.version = 11 : i64} {
  func.func @_conv_stats_kernel(%arg0: i32, %arg1: i32, %arg2: memref<1x128x64xf32, #tpu.memory_space<vmem>>, %arg3: memref<64x8xf32, #tpu.memory_space<vmem>>, %arg4: memref<1x8x128xf32, #tpu.memory_space<vmem>>, %arg5: memref<1x1x1x8xf32, #tpu.memory_space<vmem>>, %arg6: memref<1x1x1x8xf32, #tpu.memory_space<vmem>>) attributes {dimension_semantics = [#tpu.dimension_semantics<parallel>, #tpu.dimension_semantics<parallel>], iteration_bounds = array<i64: 2, 1>, scalar_prefetch = 0 : i64, scratch_operands = 0 : i64, tpu.core_type = #tpu.core_type<tc>, window_params = [{transform_indices = @transform_0, window_bounds = array<i64: 1, 128, 64>}, {pipeline_mode = #tpu.pipeline_mode<synchronous>, transform_indices = @transform_1, window_bounds = array<i64: 64, 8>}, {transform_indices = @transform_2, window_bounds = array<i64: 1, 8, 128>}, {transform_indices = @transform_3, window_bounds = array<i64: 1, 1, 1, 8>}, {transform_indices = @transform_4, window_bounds = array<i64: 1, 1, 1, 8>}]} {
    %c0 = arith.constant 0 : index
    %c0_0 = arith.constant 0 : index
    %c0_1 = arith.constant 0 : index
    %0 = vector.load %arg2[%c0, %c0_0, %c0_1] : memref<1x128x64xf32, #tpu.memory_space<vmem>>, vector<1x128x64xf32>
    %1 = vector.shape_cast %0 : vector<1x128x64xf32> to vector<128x64xf32>
    %c0_2 = arith.constant 0 : index
    %c0_3 = arith.constant 0 : index
    %2 = vector.load %arg3[%c0_2, %c0_3] : memref<64x8xf32, #tpu.memory_space<vmem>>, vector<64x8xf32>
    %cst = arith.constant dense<0.000000e+00> : vector<128x8xf32>
    %3 = tpu.matmul %1, %2, %cst {dimension_numbers = #tpu.dot_dimension_numbers<[1], [0], [0], [1], [0, 0, 1, 1], [], []>} : vector<128x64xf32>, vector<64x8xf32>, vector<128x8xf32> -> vector<128x8xf32>
    %cst_4 = arith.constant dense<0.000000e+00> : vector<8xf32>
    %4 = vector.multi_reduction <add>, %3, %cst_4 [0] : vector<128x8xf32> to vector<8xf32>
    %5 = vector.shape_cast %4 : vector<8xf32> to vector<1x8xf32>
    %c0_5 = arith.constant 0 : index
    %c0_6 = arith.constant 0 : index
    %c0_7 = arith.constant 0 : index
    %c0_8 = arith.constant 0 : index
    %6 = vector.load %arg5[%c0_5, %c0_6, %c0_7, %c0_8] : memref<1x1x1x8xf32, #tpu.memory_space<vmem>>, vector<1x1x1x8xf32>
    %7 = vector.shape_cast %6 : vector<1x1x1x8xf32> to vector<1x8xf32>
    %8 = vector.shape_cast %5 : vector<1x8xf32> to vector<1x1x1x8xf32>
    tpu.vector_store %arg5[%c0_5, %c0_6, %c0_7, %c0_8], %8 {strides = array<i32>} : memref<1x1x1x8xf32, #tpu.memory_space<vmem>>, vector<1x1x1x8xf32>,
    %9 = arith.mulf %3, %3 : vector<128x8xf32>
    %cst_9 = arith.constant dense<0.000000e+00> : vector<8xf32>
    %10 = vector.multi_reduction <add>, %9, %cst_9 [0] : vector<128x8xf32> to vector<8xf32>
    %11 = vector.shape_cast %10 : vector<8xf32> to vector<1x8xf32>
    %c0_10 = arith.constant 0 : index
    %c0_11 = arith.constant 0 : index
    %c0_12 = arith.constant 0 : index
    %c0_13 = arith.constant 0 : index
    %12 = vector.load %arg6[%c0_10, %c0_11, %c0_12, %c0_13] : memref<1x1x1x8xf32, #tpu.memory_space<vmem>>, vector<1x1x1x8xf32>
    %13 = vector.shape_cast %12 : vector<1x1x1x8xf32> to vector<1x8xf32>
    %14 = vector.shape_cast %11 : vector<1x8xf32> to vector<1x1x1x8xf32>
    tpu.vector_store %arg6[%c0_10, %c0_11, %c0_12, %c0_13], %14 {strides = array<i32>} : memref<1x1x1x8xf32, #tpu.memory_space<vmem>>, vector<1x1x1x8xf32>,
    %15 = tpu.transpose %3, [1, 0] : vector<128x8xf32> -> vector<8x128xf32>
    %c0_14 = arith.constant 0 : index
    %c0_15 = arith.constant 0 : index
    %c0_16 = arith.constant 0 : index
    %16 = vector.load %arg4[%c0_14, %c0_15, %c0_16] : memref<1x8x128xf32, #tpu.memory_space<vmem>>, vector<1x8x128xf32>
    %17 = vector.shape_cast %16 : vector<1x8x128xf32> to vector<8x128xf32>
    %18 = vector.shape_cast %15 : vector<8x128xf32> to vector<1x8x128xf32>
    tpu.vector_store %arg4[%c0_14, %c0_15, %c0_16], %18 {strides = array<i32>} : memref<1x8x128xf32, #tpu.memory_space<vmem>>, vector<1x8x128xf32>,
    return
  }
  func.func @transform_0(%arg0: i32, %arg1: i32) -> (i32, i32, i32) {
    %c0_i32 = arith.constant 0 : i32
    %c0_i32_0 = arith.constant 0 : i32
    return %arg0, %arg1, %c0_i32 : i32, i32, i32
  }
  func.func @transform_1(%arg0: i32, %arg1: i32) -> (i32, i32) {
    %c0_i32 = arith.constant 0 : i32
    %c0_i32_0 = arith.constant 0 : i32
    %c0_i32_1 = arith.constant 0 : i32
    return %c0_i32, %c0_i32_0 : i32, i32
  }
  func.func @transform_2(%arg0: i32, %arg1: i32) -> (i32, i32, i32) {
    %c0_i32 = arith.constant 0 : i32
    %c0_i32_0 = arith.constant 0 : i32
    return %arg0, %c0_i32, %arg1 : i32, i32, i32
  }
  func.func @transform_3(%arg0: i32, %arg1: i32) -> (i32, i32, i32, i32) {
    %c0_i32 = arith.constant 0 : i32
    %c0_i32_0 = arith.constant 0 : i32
    %c0_i32_1 = arith.constant 0 : i32
    return %arg0, %arg1, %c0_i32, %c0_i32_0 : i32, i32, i32, i32
  }
  func.func @transform_4(%arg0: i32, %arg1: i32) -> (i32, i32, i32, i32) {
    %c0_i32 = arith.constant 0 : i32
    %c0_i32_0 = arith.constant 0 : i32
    %c0_i32_1 = arith.constant 0 : i32
    return %arg0, %arg1, %c0_i32, %c0_i32_0 : i32, i32, i32, i32
  }
}

module attributes {stable_mosaic.version = 11 : i64} {
  func.func @_norm_act_kernel(%arg0: i32, %arg1: i32, %arg2: memref<1x8x128xf32, #tpu.memory_space<vmem>>, %arg3: memref<1x8x1xf32, #tpu.memory_space<vmem>>, %arg4: memref<1x8x1xf32, #tpu.memory_space<vmem>>, %arg5: memref<1x8x128xf32, #tpu.memory_space<vmem>>) attributes {dimension_semantics = [#tpu.dimension_semantics<parallel>, #tpu.dimension_semantics<parallel>], iteration_bounds = array<i64: 2, 1>, scalar_prefetch = 0 : i64, scratch_operands = 0 : i64, tpu.core_type = #tpu.core_type<tc>, window_params = [{transform_indices = @transform_0, window_bounds = array<i64: 1, 8, 128>}, {transform_indices = @transform_1, window_bounds = array<i64: 1, 8, 1>}, {transform_indices = @transform_2, window_bounds = array<i64: 1, 8, 1>}, {transform_indices = @transform_3, window_bounds = array<i64: 1, 8, 128>}]} {
    %c0 = arith.constant 0 : index
    %c0_0 = arith.constant 0 : index
    %c0_1 = arith.constant 0 : index
    %0 = vector.load %arg2[%c0, %c0_0, %c0_1] : memref<1x8x128xf32, #tpu.memory_space<vmem>>, vector<1x8x128xf32>
    %1 = vector.shape_cast %0 : vector<1x8x128xf32> to vector<8x128xf32>
    %c0_2 = arith.constant 0 : index
    %c0_3 = arith.constant 0 : index
    %c0_4 = arith.constant 0 : index
    %2 = vector.load %arg3[%c0_2, %c0_3, %c0_4] : memref<1x8x1xf32, #tpu.memory_space<vmem>>, vector<1x8x1xf32>
    %3 = vector.shape_cast %2 : vector<1x8x1xf32> to vector<8x1xf32>
    %4 = vector.broadcast %3 : vector<8x1xf32> to vector<8x128xf32>
    %5 = arith.mulf %1, %4 : vector<8x128xf32>
    %c0_5 = arith.constant 0 : index
    %c0_6 = arith.constant 0 : index
    %c0_7 = arith.constant 0 : index
    %6 = vector.load %arg4[%c0_5, %c0_6, %c0_7] : memref<1x8x1xf32, #tpu.memory_space<vmem>>, vector<1x8x1xf32>
    %7 = vector.shape_cast %6 : vector<1x8x1xf32> to vector<8x1xf32>
    %8 = vector.broadcast %7 : vector<8x1xf32> to vector<8x128xf32>
    %9 = arith.addf %5, %8 : vector<8x128xf32>
    %cst = arith.constant 0.000000e+00 : f32
    %10 = vector.broadcast %cst : f32 to vector<8x128xf32>
    %11 = arith.cmpf oge, %9, %10 : vector<8x128xf32>
    %cst_8 = arith.constant 2.000000e-01 : f32
    %12 = vector.broadcast %cst_8 : f32 to vector<8x128xf32>
    %13 = arith.mulf %12, %9 : vector<8x128xf32>
    %14 = arith.select %11, %9, %13 : vector<8x128xi1>, vector<8x128xf32>
    %c0_9 = arith.constant 0 : index
    %c0_10 = arith.constant 0 : index
    %c0_11 = arith.constant 0 : index
    %15 = vector.load %arg5[%c0_9, %c0_10, %c0_11] : memref<1x8x128xf32, #tpu.memory_space<vmem>>, vector<1x8x128xf32>
    %16 = vector.shape_cast %15 : vector<1x8x128xf32> to vector<8x128xf32>
    %17 = vector.shape_cast %14 : vector<8x128xf32> to vector<1x8x128xf32>
    tpu.vector_store %arg5[%c0_9, %c0_10, %c0_11], %17 {strides = array<i32>} : memref<1x8x128xf32, #tpu.memory_space<vmem>>, vector<1x8x128xf32>,
    return
  }
  func.func @transform_0(%arg0: i32, %arg1: i32) -> (i32, i32, i32) {
    %c0_i32 = arith.constant 0 : i32
    %c0_i32_0 = arith.constant 0 : i32
    return %arg0, %c0_i32, %arg1 : i32, i32, i32
  }
  func.func @transform_1(%arg0: i32, %arg1: i32) -> (i32, i32, i32) {
    %c0_i32 = arith.constant 0 : i32
    %c0_i32_0 = arith.constant 0 : i32
    %c0_i32_1 = arith.constant 0 : i32
    return %arg0, %c0_i32, %c0_i32_0 : i32, i32, i32
  }
  func.func @transform_2(%arg0: i32, %arg1: i32) -> (i32, i32, i32) {
    %c0_i32 = arith.constant 0 : i32
    %c0_i32_0 = arith.constant 0 : i32
    %c0_i32_1 = arith.constant 0 : i32
    return %arg0, %c0_i32, %c0_i32_0 : i32, i32, i32
  }
  func.func @transform_3(%arg0: i32, %arg1: i32) -> (i32, i32, i32) {
    %c0_i32 = arith.constant 0 : i32
    %c0_i32_0 = arith.constant 0 : i32
    return %arg0, %c0_i32, %arg1 : i32, i32, i32
  }
}

</mosaic_0001>

<llo_original>
// kernel: downblock_forward.3
$region0: #{downblock_forward.3}
  #allocation0 [shape = 'u32[]', space=smem, size = 0x4, offset = 0x4, fixed_abs, tag = 'smem constant byte address 0x4 - core index']
  #allocation1 [shape = 'u32[144,128]{1,0:T(1,128)}', space=vmem, size = 0x12000, scoped, tag = 'internal scratch']
  %s0 = inlined_call_operand.vmem [shape: f32[2,8,128], index: 0, kind: input, shape index: {}]
  %s1 = inlined_call_operand.vmem [shape: f32[2,8,1], index: 1, kind: input, shape index: {}]
  %s2 = inlined_call_operand.vmem [shape: f32[2,8,1], index: 2, kind: input, shape index: {}]
  %s3 = inlined_call_operand.vmem [shape: f32[2,8,128], index: 3, kind: output, shape index: {}]
  %s4 = sld [smem:[#allocation0]]
  $region45: #{downblock_forward.3} parent=0
    _
  %s6 = ssub.s32 1, %s4
  %s7 = scalar_select 0, %s6, %s4
  loop: start=0, step=1, limit=4
  $region2: #{downblock_forward.3} parent=0 // loop_pre_header
    _
  $region3: #{downblock_forward.3} parent=0 // loop_header
    %s9 = sphi 0, %s13
    %p10 = scmp.ge.s32.totalorder %s9, 4
    %s16 = sphi 0, %s28
    %s17 = sphi 0, %s24
    %s18 = sphi 0, %s16
    %s19 = sphi 0, %s17
    %s20 = sphi 0, %s18
    %s21 = sphi 0, %s19
    %s33 = sphi 0, %s35
    %s36 = sphi 0, %s33
    %s37 = sphi 0, %s36
    %s53 = sphi 0, %s37
    %s59 = sphi 0, %s61
    %s62 = sphi 0, %s59
    %s63 = sphi 0, %s62
    %s79 = sphi 0, %s63
    %s85 = sphi 0, %s87
    %s88 = sphi 0, %s85
    %s89 = sphi 0, %s88
    %s105 = sphi 0, %s89
    %s113 = sphi 0, %s115
    %s116 = sphi 0, %s113
    %s117 = sphi 0, %s116
    %s133 = sphi 0, %s117
  $region4: #{downblock_forward.3} parent=0 // loop_header_branch
    %12 = sbr.rel (%p10) target = $region8
  $region5: #{downblock_forward.3} parent=0 // loop_body
    %s14 = ssub.s32 %s9, 1
    %s15 = ssub.s32 %s9, 2
    %s22 = sadd.s32 1, %s17
    %p23 = scmp.ge.s32.totalorder %s22, 1
    %s24 = scalar_select %p23, 0, %s22
    %s25 = sadd.s32 1, %s16
    %s26 = scalar_select %p23, %s25, %s16
    %p27 = scmp.ge.s32.totalorder %s26, 2
    %s28 = scalar_select %p27, 0, %s26
    %s29 = ssub.s32 %s16, %s28
    %s30 = ssub.s32 %s17, %s24
    %s31 = sor.u32 %s29, %s30
    %p32 = scmp.eq.s32.totalorder %s31, 0
    %s34 = sadd.s32 %s33, 1
    %s35 = scalar_select %p32, %s33, %s34
    %p38 = pneg %p32
    %p39 = scmp.eq.s32.totalorder %s9, 1
    %p40 = por %p38, %p39
    %p41 = scmp.ne.s32.totalorder %s33, %s36
    %p42 = scmp.eq.s32.totalorder %s9, 0
    %p43 = por %p41, %p42
    %p44 = scmp.ne.s32.totalorder %s33, %s36
    %p45 = scmp.eq.s32.totalorder %s14, 1
    %p46 = por %p44, %p45
    %p47 = scmp.ne.s32.totalorder %s36, %s37
    %p48 = scmp.eq.s32.totalorder %s14, 0
    %p49 = por %p47, %p48
    %p50 = scmp.ne.s32.totalorder %s36, %s37
    %p51 = scmp.eq.s32.totalorder %s15, 1
    %p52 = por %p50, %p51
    %p54 = scmp.ne.s32.totalorder %s37, %s53
    %p55 = scmp.eq.s32.totalorder %s15, 0
    %p56 = por %p54, %p55
    %s57 = ssub.s32 %s16, %s28
    %p58 = scmp.eq.s32.totalorder %s57, 0
    %s60 = sadd.s32 %s59, 1
    %s61 = scalar_select %p58, %s59, %s60
    %p64 = pneg %p58
    %p65 = scmp.eq.s32.totalorder %s9, 1
    %p66 = por %p64, %p65
    %p67 = scmp.ne.s32.totalorder %s59, %s62
    %p68 = scmp.eq.s32.totalorder %s9, 0
    %p69 = por %p67, %p68
    %p70 = scmp.ne.s32.totalorder %s59, %s62
    %p71 = scmp.eq.s32.totalorder %s14, 1
    %p72 = por %p70, %p71
    %p73 = scmp.ne.s32.totalorder %s62, %s63
    %p74 = scmp.eq.s32.totalorder %s14, 0
    %p75 = por %p73, %p74
    %p76 = scmp.ne.s32.totalorder %s62, %s63
    %p77 = scmp.eq.s32.totalorder %s15, 1
    %p78 = por %p76, %p77
    %p80 = scmp.ne.s32.totalorder %s63, %s79
    %p81 = scmp.eq.s32.totalorder %s15, 0
    %p82 = por %p80, %p81
    %s83 = ssub.s32 %s16, %s28
    %p84 = scmp.eq.s32.totalorder %s83, 0
    %s86 = sadd.s32 %s85, 1
    %s87 = scalar_select %p84, %s85, %s86
    %p90 = pneg %p84
    %p91 = scmp.eq.s32.totalorder %s9, 1
    %p92 = por %p90, %p91
    %p93 = scmp.ne.s32.totalorder %s85, %s88
    %p94 = scmp.eq.s32.totalorder %s9, 0
    %p95 = por %p93, %p94
    %p96 = scmp.ne.s32.totalorder %s85, %s88
    %p97 = scmp.eq.s32.totalorder %s14, 1
    %p98 = por %p96, %p97
    %p99 = scmp.ne.s32.totalorder %s88, %s89
    %p100 = scmp.eq.s32.totalorder %s14, 0
    %p101 = por %p99, %p100
    %p102 = scmp.ne.s32.totalorder %s88, %s89
    %p103 = scmp.eq.s32.totalorder %s15, 1
    %p104 = por %p102, %p103
    %p106 = scmp.ne.s32.totalorder %s89, %s105
    %p107 = scmp.eq.s32.totalorder %s15, 0
    %p108 = por %p106, %p107
    %s109 = ssub.s32 %s16, %s28
    %s110 = ssub.s32 %s17, %s24
    %s111 = sor.u32 %s109, %s110
    %p112 = scmp.eq.s32.totalorder %s111, 0
    %s114 = sadd.s32 %s113, 1
    %s115 = scalar_select %p112, %s113, %s114
    %p118 = pneg %p112
    %p119 = scmp.eq.s32.totalorder %s9, 1
    %p120 = por %p118, %p119
    %p121 = scmp.ne.s32.totalorder %s113, %s116
    %p122 = scmp.eq.s32.totalorder %s9, 0
    %p123 = por %p121, %p122
    %p124 = scmp.ne.s32.totalorder %s113, %s116
    %p125 = scmp.eq.s32.totalorder %s14, 1
    %p126 = por %p124, %p125
    %p127 = scmp.ne.s32.totalorder %s116, %s117
    %p128 = scmp.eq.s32.totalorder %s14, 0
    %p129 = por %p127, %p128
    %p130 = scmp.ne.s32.totalorder %s116, %s117
    %p131 = scmp.eq.s32.totalorder %s15, 1
    %p132 = por %p130, %p131
    %p134 = scmp.ne.s32.totalorder %s117, %s133
    %p135 = scmp.eq.s32.totalorder %s15, 0
    %p136 = por %p134, %p135
    %p137 = scmp.le.s32.totalorder 1, %s9
    %p138 = scmp.lt.s32.totalorder %s9, 3
    %p139 = pnand %p137, %p138
    %p140 = pneg %p139
    // Predicated region
    $region9: #{downblock_forward.3} parent=5 // pred_check
      _
    $region10: #{downblock_forward.3} parent=5 // pred_check_branch
      %142 = sbr.rel (%p139) target = $region12
    $region11: #{downblock_forward.3} parent=5 // pred_region
      %s143 = ssub.s32 %s9, 1
    $region12: #{downblock_forward.3} parent=5 // pred_fallthru
      _
    %p144 = scmp.lt.s32.totalorder %s9, 2
    // Predicated region
    $region13: #{downblock_forward.3} parent=5 // pred_check
      %p145 = pneg %p144
    $region14: #{downblock_forward.3} parent=5 // pred_check_branch
      %147 = sbr.rel (%p145) target = $region16
    $region15: #{downblock_forward.3} parent=5 // pred_region
      // Predicated region
      $region17: #{downblock_forward.3} parent=15 // pred_check
        %p148 = pneg %p43
      $region18: #{downblock_forward.3} parent=15 // pred_check_branch
        %150 = sbr.rel (%p148) target = $region20
      $region19: #{downblock_forward.3} parent=15 // pred_region
        %p151 = scmp.lt.s32.totalorder %s16, 1
        %s152 = scalar_select %p151, %s16, 1
        %p153 = scmp.lt.s32.totalorder %s17, 0
        %s154 = scalar_select %p153, %s17, 0
        %s155 = sadd.s32 %s154, %s152
        %s156 = smul.addr %s155, 8
        %s157 = scalar_lea.vmem %s0, %s156
      $region20: #{downblock_forward.3} parent=15 // pred_fallthru
        _
      // Predicated region
      $region21: #{downblock_forward.3} parent=15 // pred_check
        %p158 = pneg %p69
      $region22: #{downblock_forward.3} parent=15 // pred_check_branch
        %160 = sbr.rel (%p158) target = $region24
      $region23: #{downblock_forward.3} parent=15 // pred_region
        %p161 = scmp.lt.s32.totalorder %s16, 1
        %s162 = scalar_select %p161, %s16, 1
        %s163 = smul.addr %s162, 8
        %s164 = scalar_lea.vmem %s1, %s163
      $region24: #{downblock_forward.3} parent=15 // pred_fallthru
        _
      // Predicated region
      $region25: #{downblock_forward.3} parent=15 // pred_check
        %p165 = pneg %p95
      $region26: #{downblock_forward.3} parent=15 // pred_check_branch
        %167 = sbr.rel (%p165) target = $region28
      $region27: #{downblock_forward.3} parent=15 // pred_region
        %p168 = scmp.lt.s32.totalorder %s16, 1
        %s169 = scalar_select %p168, %s16, 1
        %s170 = smul.addr %s169, 8
        %s171 = scalar_lea.vmem %s2, %s170
      $region28: #{downblock_forward.3} parent=15 // pred_fallthru
        _
    $region16: #{downblock_forward.3} parent=5 // pred_fallthru
      _
    %p172 = scmp.le.s32.totalorder 1, %s9
    %p173 = scmp.lt.s32.totalorder %s9, 3
    %p174 = pnand %p172, %p173
    %p175 = pneg %p174
    // Predicated region
    $region29: #{downblock_forward.3} parent=5 // pred_check
      _
    $region30: #{downblock_forward.3} parent=5 // pred_check_branch
      %177 = sbr.rel (%p174) target = $region32
    $region31: #{downblock_forward.3} parent=5 // pred_region
      %s178 = ssub.s32 %s9, 1
      %p179 = scmp.lt.s32.totalorder %s18, 1
      %s180 = scalar_select %p179, %s18, 1
      %p181 = scmp.lt.s32.totalorder %s19, 0
      %s182 = scalar_select %p181, %s19, 0
      %s183 = sadd.s32 %s182, %s180
      %s184 = smul.addr %s183, 8
      %s185 = scalar_lea.vmem %s0, %s184
      %p186 = pneg %p49
      %p187 = pneg %p46
      %p188 = scmp.lt.s32.totalorder %s18, 1
      %s189 = scalar_select %p188, %s18, 1
      %s190 = smul.addr %s189, 8
      %s191 = scalar_lea.vmem %s1, %s190
      %p192 = pneg %p75
      %p193 = pneg %p72
      %p194 = scmp.lt.s32.totalorder %s18, 1
      %s195 = scalar_select %p194, %s18, 1
      %s196 = smul.addr %s195, 8
      %s197 = scalar_lea.vmem %s2, %s196
      %p198 = pneg %p101
      %p199 = pneg %p98
      %p200 = pneg %p129
      %p201 = pneg %p126
      %p202 = scmp.lt.s32.totalorder %s18, 1
      %s203 = scalar_select %p202, %s18, 1
      %p204 = scmp.lt.s32.totalorder %s19, 0
      %s205 = scalar_select %p204, %s19, 0
      %s206 = sadd.s32 %s205, %s203
      %s207 = smul.addr %s206, 8
      %s208 = scalar_lea.vmem %s3, %s207
      %p209 = scmp.lt.s32.totalorder %s18, 1
      %s210 = scalar_select %p209, %s18, 1
      %p211 = scmp.lt.s32.totalorder %s19, 0
      %s212 = scalar_select %p211, %s19, 0
      %s213 = sadd.s32 %s212, %s210
      %s214 = smul.addr %s213, 8
      %s215 = scalar_lea.vmem %s0, %s214
      %p216 = scmp.lt.s32.totalorder %s18, 1
      %s217 = scalar_select %p216, %s18, 1
      %s218 = smul.addr %s217, 8
      %s219 = scalar_lea.vmem %s1, %s218
      %p220 = scmp.lt.s32.totalorder %s18, 1
      %s221 = scalar_select %p220, %s18, 1
      %s222 = smul.addr %s221, 8
      %s223 = scalar_lea.vmem %s2, %s222
      %p224 = scmp.lt.s32.totalorder %s18, 1
      %s225 = scalar_select %p224, %s18, 1
      %p226 = scmp.lt.s32.totalorder %s19, 0
      %s227 = scalar_select %p226, %s19, 0
      %s228 = sadd.s32 %s227, %s225
      %s229 = smul.addr %s228, 8
      %s230 = scalar_lea.vmem %s3, %s229
      %v231 = vld [vmem:[%s215] sm:$0xff]
      %v232 = vld [vmem:[%s219] sm:$0xff]
      %234 = vset.pattern.permute.xlu0 0
      %235 = vperm.xlu0 %234, %v232
      %v236 = vpop.permute.xlu0 %235
      %v238 = vmul.f32 %v231, %v236
      %v239 = vld [vmem:[%s223] sm:$0xff]
      %241 = vset.pattern.permute.xlu0 0
      %242 = vperm.xlu0 %241, %v239
      %v243 = vpop.permute.xlu0 %242
      %v245 = vadd.f32 %v238, %v243
      %vm246 = vcmp.ge.f32.partialorder %v245, 0.0
      %v247 = vmul.f32 %v245, 0.2
      %v248 = vsel %vm246, %v245, %v247
      %249 = vst [vmem:[%s230] sm:$0xff] %v248
      %p250 = scmp.lt.s32.totalorder %s18, 1
      %s251 = scalar_select %p250, %s18, 1
      %p252 = scmp.lt.s32.totalorder %s19, 0
      %s253 = scalar_select %p252, %s19, 0
      %s254 = sadd.s32 %s253, %s251
      %s255 = smul.addr %s254, 8
      %s256 = scalar_lea.vmem %s3, %s255
      // Predicated region
      $region33: #{downblock_forward.3} parent=31 // pred_check
        %p257 = pneg %p126
      $region34: #{downblock_forward.3} parent=31 // pred_check_branch
        %259 = sbr.rel (%p257) target = $region36
      $region35: #{downblock_forward.3} parent=31 // pred_region
        _
      $region36: #{downblock_forward.3} parent=31 // pred_fallthru
        _
    $region32: #{downblock_forward.3} parent=5 // pred_fallthru
      _
    %p260 = scmp.le.s32.totalorder 2, %s9
    // Predicated region
    $region37: #{downblock_forward.3} parent=5 // pred_check
      %p261 = pneg %p260
    $region38: #{downblock_forward.3} parent=5 // pred_check_branch
      %263 = sbr.rel (%p261) target = $region40
    $region39: #{downblock_forward.3} parent=5 // pred_region
      %s264 = ssub.s32 %s9, 2
      // Predicated region
      $region41: #{downblock_forward.3} parent=39 // pred_check
        %p265 = pneg %p132
      $region42: #{downblock_forward.3} parent=39 // pred_check_branch
        %267 = sbr.rel (%p265) target = $region44
      $region43: #{downblock_forward.3} parent=39 // pred_region
        %p268 = scmp.lt.s32.totalorder %s20, 1
        %s269 = scalar_select %p268, %s20, 1
        %p270 = scmp.lt.s32.totalorder %s21, 0
        %s271 = scalar_select %p270, %s21, 0
        %s272 = sadd.s32 %s271, %s269
        %s273 = smul.addr %s272, 8
        %s274 = scalar_lea.vmem %s3, %s273
      $region44: #{downblock_forward.3} parent=39 // pred_fallthru
        _
    $region40: #{downblock_forward.3} parent=5 // pred_fallthru
      _
  $region6: #{downblock_forward.3} parent=0 // loop_footer
    %s13 = sadd.s32 1, %s9
  $region7: #{downblock_forward.3} parent=0 // loop_footer_branch
    %8 = sbr.rel target = $region3
  $region8: #{downblock_forward.3} parent=0 // loop_exit
    _

// kernel: downblock_forward.2
$region0: #{downblock_forward.2}
  #allocation0 [shape = 'u32[]', space=smem, size = 0x4, offset = 0x4, fixed_abs, tag = 'smem constant byte address 0x4 - core index']
  #allocation1 [shape = 'u32[144,128]{1,0:T(1,128)}', space=vmem, size = 0x12000, scoped, tag = 'internal scratch']
  %s0 = inlined_call_operand.vmem [shape: f32[2,128,64], index: 0, kind: input, shape index: {}]
  %s1 = inlined_call_operand.vmem [shape: f32[64,8], index: 1, kind: input, shape index: {}]
  %s2 = inlined_call_operand.vmem [shape: f32[2,8,128], index: 2, kind: output, shape index: {0}]
  %s3 = inlined_call_operand.vmem [shape: f32[2,1,1,8], index: 3, kind: output, shape index: {1}]
  %s4 = inlined_call_operand.vmem [shape: f32[2,1,1,8], index: 4, kind: output, shape index: {2}]
  %5 = xla_tuple %s2, %s3, %s4
  %s6 = sld [smem:[#allocation0]]
  $region57: #{downblock_forward.2} parent=0
    _
  %s8 = ssub.s32 1, %s6
  %s9 = scalar_select 0, %s8, %s6
  loop: start=0, step=1, limit=4
  $region2: #{downblock_forward.2} parent=0 // loop_pre_header
    _
  $region3: #{downblock_forward.2} parent=0 // loop_header
    %s11 = sphi 0, %s15
    %p12 = scmp.ge.s32.totalorder %s11, 4
    %s18 = sphi 0, %s30
    %s19 = sphi 0, %s26
    %s20 = sphi 0, %s18
    %s21 = sphi 0, %s19
    %s22 = sphi 0, %s20
    %s23 = sphi 0, %s21
    %s35 = sphi 0, %s37
    %s38 = sphi 0, %s35
    %s39 = sphi 0, %s38
    %s55 = sphi 0, %s39
    %s59 = sphi 0, %s59
    %s61 = sphi 0, %s59
    %s62 = sphi 0, %s61
    %s76 = sphi 0, %s62
    %s84 = sphi 0, %s86
    %s87 = sphi 0, %s84
    %s88 = sphi 0, %s87
    %s104 = sphi 0, %s88
    %s112 = sphi 0, %s114
    %s115 = sphi 0, %s112
    %s116 = sphi 0, %s115
    %s132 = sphi 0, %s116
    %s140 = sphi 0, %s142
    %s143 = sphi 0, %s140
    %s144 = sphi 0, %s143
    %s160 = sphi 0, %s144
  $region4: #{downblock_forward.2} parent=0 // loop_header_branch
    %14 = sbr.rel (%p12) target = $region8
  $region5: #{downblock_forward.2} parent=0 // loop_body
    %s16 = ssub.s32 %s11, 1
    %s17 = ssub.s32 %s11, 2
    %s24 = sadd.s32 1, %s19
    %p25 = scmp.ge.s32.totalorder %s24, 1
    %s26 = scalar_select %p25, 0, %s24
    %s27 = sadd.s32 1, %s18
    %s28 = scalar_select %p25, %s27, %s18
    %p29 = scmp.ge.s32.totalorder %s28, 2
    %s30 = scalar_select %p29, 0, %s28
    %s31 = ssub.s32 %s18, %s30
    %s32 = ssub.s32 %s19, %s26
    %s33 = sor.u32 %s31, %s32
    %p34 = scmp.eq.s32.totalorder %s33, 0
    %s36 = sadd.s32 %s35, 1
    %s37 = scalar_select %p34, %s35, %s36
    %p40 = pneg %p34
    %p41 = scmp.eq.s32.totalorder %s11, 1
    %p42 = por %p40, %p41
    %p43 = scmp.ne.s32.totalorder %s35, %s38
    %p44 = scmp.eq.s32.totalorder %s11, 0
    %p45 = por %p43, %p44
    %p46 = scmp.ne.s32.totalorder %s35, %s38
    %p47 = scmp.eq.s32.totalorder %s16, 1
    %p48 = por %p46, %p47
    %p49 = scmp.ne.s32.totalorder %s38, %s39
    %p50 = scmp.eq.s32.totalorder %s16, 0
    %p51 = por %p49, %p50
    %p52 = scmp.ne.s32.totalorder %s38, %s39
    %p53 = scmp.eq.s32.totalorder %s17, 1
    %p54 = por %p52, %p53
    %p56 = scmp.ne.s32.totalorder %s39, %s55
    %p57 = scmp.eq.s32.totalorder %s17, 0
    %p58 = por %p56, %p57
    %s60 = sadd.s32 %s59, 1
    %p63 = scmp.eq.s32.totalorder %s11, 1
    %p64 = scmp.ne.s32.totalorder %s59, %s61
    %p65 = scmp.eq.s32.totalorder %s11, 0
    %p66 = por %p64, %p65
    %p67 = scmp.ne.s32.totalorder %s59, %s61
    %p68 = scmp.eq.s32.totalorder %s16, 1
    %p69 = por %p67, %p68
    %p70 = scmp.ne.s32.totalorder %s61, %s62
    %p71 = scmp.eq.s32.totalorder %s16, 0
    %p72 = por %p70, %p71
    %p73 = scmp.ne.s32.totalorder %s61, %s62
    %p74 = scmp.eq.s32.totalorder %s17, 1
    %p75 = por %p73, %p74
    %p77 = scmp.ne.s32.totalorder %s62, %s76
    %p78 = scmp.eq.s32.totalorder %s17, 0
    %p79 = por %p77, %p78
    %s80 = ssub.s32 %s18, %s30
    %s81 = ssub.s32 %s19, %s26
    %s82 = sor.u32 %s80, %s81
    %p83 = scmp.eq.s32.totalorder %s82, 0
    %s85 = sadd.s32 %s84, 1
    %s86 = scalar_select %p83, %s84, %s85
    %p89 = pneg %p83
    %p90 = scmp.eq.s32.totalorder %s11, 1
    %p91 = por %p89, %p90
    %p92 = scmp.ne.s32.totalorder %s84, %s87
    %p93 = scmp.eq.s32.totalorder %s11, 0
    %p94 = por %p92, %p93
    %p95 = scmp.ne.s32.totalorder %s84, %s87
    %p96 = scmp.eq.s32.totalorder %s16, 1
    %p97 = por %p95, %p96
    %p98 = scmp.ne.s32.totalorder %s87, %s88
    %p99 = scmp.eq.s32.totalorder %s16, 0
    %p100 = por %p98, %p99
    %p101 = scmp.ne.s32.totalorder %s87, %s88
    %p102 = scmp.eq.s32.totalorder %s17, 1
    %p103 = por %p101, %p102
    %p105 = scmp.ne.s32.totalorder %s88, %s104
    %p106 = scmp.eq.s32.totalorder %s17, 0
    %p107 = por %p105, %p106
    %s108 = ssub.s32 %s18, %s30
    %s109 = ssub.s32 %s19, %s26
    %s110 = sor.u32 %s108, %s109
    %p111 = scmp.eq.s32.totalorder %s110, 0
    %s113 = sadd.s32 %s112, 1
    %s114 = scalar_select %p111, %s112, %s113
    %p117 = pneg %p111
    %p118 = scmp.eq.s32.totalorder %s11, 1
    %p119 = por %p117, %p118
    %p120 = scmp.ne.s32.totalorder %s112, %s115
    %p121 = scmp.eq.s32.totalorder %s11, 0
    %p122 = por %p120, %p121
    %p123 = scmp.ne.s32.totalorder %s112, %s115
    %p124 = scmp.eq.s32.totalorder %s16, 1
    %p125 = por %p123, %p124
    %p126 = scmp.ne.s32.totalorder %s115, %s116
    %p127 = scmp.eq.s32.totalorder %s16, 0
    %p128 = por %p126, %p127
    %p129 = scmp.ne.s32.totalorder %s115, %s116
    %p130 = scmp.eq.s32.totalorder %s17, 1
    %p131 = por %p129, %p130
    %p133 = scmp.ne.s32.totalorder %s116, %s132
    %p134 = scmp.eq.s32.totalorder %s17, 0
    %p135 = por %p133, %p134
    %s136 = ssub.s32 %s18, %s30
    %s137 = ssub.s32 %s19, %s26
    %s138 = sor.u32 %s136, %s137
    %p139 = scmp.eq.s32.totalorder %s138, 0
    %s141 = sadd.s32 %s140, 1
    %s142 = scalar_select %p139, %s140, %s141
    %p145 = pneg %p139
    %p146 = scmp.eq.s32.totalorder %s11, 1
    %p147 = por %p145, %p146
    %p148 = scmp.ne.s32.totalorder %s140, %s143
    %p149 = scmp.eq.s32.totalorder %s11, 0
    %p150 = por %p148, %p149
    %p151 = scmp.ne.s32.totalorder %s140, %s143
    %p152 = scmp.eq.s32.totalorder %s16, 1
    %p153 = por %p151, %p152
    %p154 = scmp.ne.s32.totalorder %s143, %s144
    %p155 = scmp.eq.s32.totalorder %s16, 0
    %p156 = por %p154, %p155
    %p157 = scmp.ne.s32.totalorder %s143, %s144
    %p158 = scmp.eq.s32.totalorder %s17, 1
    %p159 = por %p157, %p158
    %p161 = scmp.ne.s32.totalorder %s144, %s160
    %p162 = scmp.eq.s32.totalorder %s17, 0
    %p163 = por %p161, %p162
    %p164 = scmp.le.s32.totalorder 1, %s11
    %p165 = scmp.lt.s32.totalorder %s11, 3
    %p166 = pnand %p164, %p165
    %p167 = pneg %p166
    // Predicated region
    $region9: #{downblock_forward.2} parent=5 // pred_check
      _
    $region10: #{downblock_forward.2} parent=5 // pred_check_branch
      %169 = sbr.rel (%p166) target = $region12
    $region11: #{downblock_forward.2} parent=5 // pred_region
      %s170 = ssub.s32 %s11, 1
      // Predicated region
      $region13: #{downblock_forward.2} parent=11 // pred_check
        %p171 = pneg %p72
      $region14: #{downblock_forward.2} parent=11 // pred_check_branch
        %173 = sbr.rel (%p171) target = $region16
      $region15: #{downblock_forward.2} parent=11 // pred_region
        _
      $region16: #{downblock_forward.2} parent=11 // pred_fallthru
        _
    $region12: #{downblock_forward.2} parent=5 // pred_fallthru
      _
    %p174 = scmp.lt.s32.totalorder %s11, 2
    // Predicated region
    $region17: #{downblock_forward.2} parent=5 // pred_check
      %p175 = pneg %p174
    $region18: #{downblock_forward.2} parent=5 // pred_check_branch
      %177 = sbr.rel (%p175) target = $region20
    $region19: #{downblock_forward.2} parent=5 // pred_region
      // Predicated region
      $region21: #{downblock_forward.2} parent=19 // pred_check
        %p178 = pneg %p45
      $region22: #{downblock_forward.2} parent=19 // pred_check_branch
        %180 = sbr.rel (%p178) target = $region24
      $region23: #{downblock_forward.2} parent=19 // pred_region
        %s181 = smul.u32 16, %s19
        %p182 = scmp.lt.s32.totalorder %s18, 1
        %s183 = scalar_select %p182, %s18, 1
        %p184 = scmp.lt.s32.totalorder %s181, 15
        %s185 = scalar_select %p184, %s181, 15
        %s186 = smul.addr %s183, 16
        %s187 = sadd.s32 %s185, %s186
        %s188 = smul.addr %s187, 8
        %s189 = scalar_lea.vmem %s0, %s188
        %s190 = smul.u32 16, %s19
      $region24: #{downblock_forward.2} parent=19 // pred_fallthru
        _
    $region20: #{downblock_forward.2} parent=5 // pred_fallthru
      _
    %p191 = scmp.le.s32.totalorder 1, %s11
    %p192 = scmp.lt.s32.totalorder %s11, 3
    %p193 = pnand %p191, %p192
    %p194 = pneg %p193
    // Predicated region
    $region25: #{downblock_forward.2} parent=5 // pred_check
      _
    $region26: #{downblock_forward.2} parent=5 // pred_check_branch
      %196 = sbr.rel (%p193) target = $region28
    $region27: #{downblock_forward.2} parent=5 // pred_region
      %s197 = ssub.s32 %s11, 1
      %s198 = smul.u32 16, %s21
      %p199 = scmp.lt.s32.totalorder %s20, 1
      %s200 = scalar_select %p199, %s20, 1
      %p201 = scmp.lt.s32.totalorder %s198, 15
      %s202 = scalar_select %p201, %s198, 15
      %s203 = smul.addr %s200, 16
      %s204 = sadd.s32 %s202, %s203
      %s205 = smul.addr %s204, 8
      %s206 = scalar_lea.vmem %s0, %s205
      %p207 = pneg %p51
      %p208 = pneg %p48
      %p209 = pneg %p72
      %p210 = pneg %p69
      %p211 = pneg %p100
      %p212 = pneg %p97
      %p213 = scmp.lt.s32.totalorder %s20, 1
      %s214 = scalar_select %p213, %s20, 1
      %p215 = scmp.lt.s32.totalorder %s21, 0
      %s216 = scalar_select %p215, %s21, 0
      %s217 = sadd.s32 %s216, %s214
      %s218 = smul.addr %s217, 8
      %s219 = scalar_lea.vmem %s2, %s218
      %p220 = pneg %p128
      %p221 = pneg %p125
      %p222 = scmp.lt.s32.totalorder %s20, 1
      %s223 = scalar_select %p222, %s20, 1
      %p224 = scmp.lt.s32.totalorder %s21, 0
      %s225 = scalar_select %p224, %s21, 0
      %s226 = sadd.s32 %s225, %s223
      %s227 = scalar_lea.vmem %s3, %s226
      %p228 = pneg %p156
      %p229 = pneg %p153
      %p230 = scmp.lt.s32.totalorder %s20, 1
      %s231 = scalar_select %p230, %s20, 1
      %p232 = scmp.lt.s32.totalorder %s21, 0
      %s233 = scalar_select %p232, %s21, 0
      %s234 = sadd.s32 %s233, %s231
      %s235 = scalar_lea.vmem %s4, %s234
      %s236 = smul.u32 16, %s21
      %p237 = scmp.lt.s32.totalorder %s20, 1
      %s238 = scalar_select %p237, %s20, 1
      %p239 = scmp.lt.s32.totalorder %s236, 15
      %s240 = scalar_select %p239, %s236, 15
      %s241 = smul.addr %s238, 16
      %s242 = sadd.s32 %s240, %s241
      %s243 = smul.addr %s242, 8
      %s244 = scalar_lea.vmem %s0, %s243
      %s245 = smul.u32 16, %s21
      %p246 = scmp.lt.s32.totalorder %s20, 1
      %s247 = scalar_select %p246, %s20, 1
      %p248 = scmp.lt.s32.totalorder %s21, 0
      %s249 = scalar_select %p248, %s21, 0
      %s250 = sadd.s32 %s249, %s247
      %s251 = smul.addr %s250, 8
      %s252 = scalar_lea.vmem %s2, %s251
      %p253 = scmp.lt.s32.totalorder %s20, 1
      %s254 = scalar_select %p253, %s20, 1
      %p255 = scmp.lt.s32.totalorder %s21, 0
      %s256 = scalar_select %p255, %s21, 0
      %s257 = sadd.s32 %s256, %s254
      %s258 = scalar_lea.vmem %s3, %s257
      %p259 = scmp.lt.s32.totalorder %s20, 1
      %s260 = scalar_select %p259, %s20, 1
      %p261 = scmp.lt.s32.totalorder %s21, 0
      %s262 = scalar_select %p261, %s21, 0
      %s263 = sadd.s32 %s262, %s260
      %s264 = scalar_lea.vmem %s4, %s263
      %v265 = vld [vmem:[%s244] sm:$0xff]
      %v266 = vld [vmem:[%s244 + $0x8] sm:$0xff]
      %v267 = vld [vmem:[%s244 + $0x10] sm:$0xff]
      %v268 = vld [vmem:[%s244 + $0x18] sm:$0xff]
      %v269 = vld [vmem:[%s244 + $0x20] sm:$0xff]
      %v270 = vld [vmem:[%s244 + $0x28] sm:$0xff]
      %v271 = vld [vmem:[%s244 + $0x30] sm:$0xff]
      %v272 = vld [vmem:[%s244 + $0x38] sm:$0xff]
      %v273 = vld [vmem:[%s244 + $0x40] sm:$0xff]
      %v274 = vld [vmem:[%s244 + $0x48] sm:$0xff]
      %v275 = vld [vmem:[%s244 + $0x50] sm:$0xff]
      %v276 = vld [vmem:[%s244 + $0x58] sm:$0xff]
      %v277 = vld [vmem:[%s244 + $0x60] sm:$0xff]
      %v278 = vld [vmem:[%s244 + $0x68] sm:$0xff]
      %v279 = vld [vmem:[%s244 + $0x70] sm:$0xff]
      %v280 = vld [vmem:[%s244 + $0x78] sm:$0xff]
      %v281 = vld [vmem:[%s1] sm:$0xff]
      %v282 = vld [vmem:[%s1 + $0x8] sm:$0xff]
      %v283 = vld [vmem:[%s1 + $0x10] sm:$0xff]
      %v284 = vld [vmem:[%s1 + $0x18] sm:$0xff]
      %v285 = vld [vmem:[%s1 + $0x20] sm:$0xff]
      %v286 = vld [vmem:[%s1 + $0x28] sm:$0xff]
      %v287 = vld [vmem:[%s1 + $0x30] sm:$0xff]
      %v288 = vld [vmem:[%s1 + $0x38] sm:$0xff]
      %vm289 = vcmask 523264
      %v291 = vsel %vm289, %v265, 0
      %v294 = vsel %vm289, %v266, 0
      %v297 = vsel %vm289, %v267, 0
      %v300 = vsel %vm289, %v268, 0
      %v303 = vsel %vm289, %v269, 0
      %v306 = vsel %vm289, %v270, 0
      %v309 = vsel %vm289, %v271, 0
      %v312 = vsel %vm289, %v272, 0
      %v315 = vsel %vm289, %v273, 0
      %v318 = vsel %vm289, %v274, 0
      %v321 = vsel %vm289, %v275, 0
      %v324 = vsel %vm289, %v276, 0
      %v327 = vsel %vm289, %v277, 0
      %v330 = vsel %vm289, %v278, 0
      %v333 = vsel %vm289, %v279, 0
      %v336 = vsel %vm289, %v280, 0
      %338 = vmatprep.subr.mxu0 0.0
      %339 = vmatpush1.msra.mxu0 %v281
      %340 = vmatprep.subr.mxu0 0.0
      %341 = vmatpush1.msra.mxu0 %v282
      %342 = vmatprep.subr.mxu0 0.0
      %343 = vmatpush1.msra.mxu0 %v283
      %344 = vmatprep.subr.mxu0 0.0
      %345 = vmatpush1.msra.mxu0 %v284
      %346 = vmatprep.subr.mxu0 0.0
      %347 = vmatpush1.msra.mxu0 %v285
      %348 = vmatprep.subr.mxu0 0.0
      %349 = vmatpush1.msra.mxu0 %v286
      %350 = vmatprep.subr.mxu0 0.0
      %351 = vmatpush1.msra.mxu0 %v287
      %352 = vmatprep.subr.mxu0 0.0
      %353 = vmatpush1.msra.mxu0 %v288
      %354 = vmatprep.subr.mxu0 0.0
      %355 = vmatpush1.msra.mxu0 0.0
      %356 = vmatprep.subr.mxu0 0.0
      %357 = vmatpush1.msra.mxu0 0.0
      %358 = vmatprep.subr.mxu0 0.0
      %359 = vmatpush1.msra.mxu0 0.0
      %360 = vmatprep.subr.mxu0 0.0
      %361 = vmatpush1.msra.mxu0 0.0
      %362 = vmatprep.subr.mxu0 0.0
      %363 = vmatpush1.msra.mxu0 0.0
      %364 = vmatprep.subr.mxu0 0.0
      %365 = vmatpush1.msra.mxu0 0.0
      %366 = vmatprep.subr.mxu0 0.0
      %367 = vmatpush1.msra.mxu0 0.0
      %368 = vmatprep.subr.mxu0 0.0
      %369 = vmatpush1.msra.mxu0 0.0
      %370 = vmatprep.subr.mxu0 0.0
      %371 = vmatpush1.msra.mxu0 0.0
      %372 = vmatprep.subr.mxu0 0.0
      %373 = vmatpush1.msra.mxu0 0.0
      %374 = vmatprep.subr.mxu0 0.0
      %375 = vmatpush1.msra.mxu0 0.0
      %376 = vmatprep.subr.mxu0 0.0
      %377 = vmatpush1.msra.mxu0 0.0
      %378 = vmatprep.subr.mxu0 0.0
      %379 = vmatpush1.msra.mxu0 0.0
      %380 = vmatprep.subr.mxu0 0.0
      %381 = vmatpush1.msra.mxu0 0.0
      %382 = vmatprep.subr.mxu0 0.0
      %383 = vmatpush1.msra.mxu0 0.0
      %384 = vmatprep.subr.mxu0 0.0
      %385 = vmatpush1.msra.mxu0 0.0
      %386 = vmatprep.subr.mxu0 0.0
      %387 = vmatpush1.msra.mxu0 0.0
      %388 = vmatprep.subr.mxu0 0.0
      %389 = vmatpush1.msra.mxu0 0.0
      %390 = vmatprep.subr.mxu0 0.0
      %391 = vmatpush1.msra.mxu0 0.0
      %392 = vmatprep.subr.mxu0 0.0
      %393 = vmatpush1.msra.mxu0 0.0
      %394 = vmatprep.subr.mxu0 0.0
      %395 = vmatpush1.msra.mxu0 0.0
      %396 = vmatprep.subr.mxu0 0.0
      %397 = vmatpush1.msra.mxu0 0.0
      %398 = vmatprep.subr.mxu0 0.0
      %399 = vmatpush1.msra.mxu0 0.0
      %400 = vmatprep.subr.mxu0 0.0
      %401 = vmatpush1.msra.mxu0 0.0
      %402 = vmatprep.mubr.f32.mxu0 0.0
      %403 = vmatmul.mubr.f32.gmra.mrb[0].mxu0 %v291
      %v404 = vpop.f32.mrb[0].mxu0
      %v405 = vadd.f32 0.0, %v404
      %v406 = vpop.f32.mrb[0].mxu0
      %407 = vmatprep.mubr.f32.mxu0 0.0
      %408 = vmatmul.mubr.f32.gmra.mrb[0].mxu0 %v294
      %v409 = vpop.f32.mrb[0].mxu0
      %v410 = vadd.f32 0.0, %v409
      %v411 = vpop.f32.mrb[0].mxu0
      %412 = vmatprep.mubr.f32.mxu0 0.0
      %413 = vmatmul.mubr.f32.gmra.mrb[0].mxu0 %v297
      %v414 = vpop.f32.mrb[0].mxu0
      %v415 = vadd.f32 0.0, %v414
      %v416 = vpop.f32.mrb[0].mxu0
      %417 = vmatprep.mubr.f32.mxu0 0.0
      %418 = vmatmul.mubr.f32.gmra.mrb[0].mxu0 %v300
      %v419 = vpop.f32.mrb[0].mxu0
      %v420 = vadd.f32 0.0, %v419
      %v421 = vpop.f32.mrb[0].mxu0
      %422 = vmatprep.mubr.f32.mxu0 0.0
      %423 = vmatmul.mubr.f32.gmra.mrb[0].mxu0 %v303
      %v424 = vpop.f32.mrb[0].mxu0
      %v425 = vadd.f32 0.0, %v424
      %v426 = vpop.f32.mrb[0].mxu0
      %427 = vmatprep.mubr.f32.mxu0 0.0
      %428 = vmatmul.mubr.f32.gmra.mrb[0].mxu0 %v306
      %v429 = vpop.f32.mrb[0].mxu0
      %v430 = vadd.f32 0.0, %v429
      %v431 = vpop.f32.mrb[0].mxu0
      %432 = vmatprep.mubr.f32.mxu0 0.0
      %433 = vmatmul.mubr.f32.gmra.mrb[0].mxu0 %v309
      %v434 = vpop.f32.mrb[0].mxu0
      %v435 = vadd.f32 0.0, %v434
      %v436 = vpop.f32.mrb[0].mxu0
      %437 = vmatprep.mubr.f32.mxu0 0.0
      %438 = vmatmul.mubr.f32.gmra.mrb[0].mxu0 %v312
      %v439 = vpop.f32.mrb[0].mxu0
      %v440 = vadd.f32 0.0, %v439
      %v441 = vpop.f32.mrb[0].mxu0
      %442 = vmatprep.mubr.f32.mxu0 0.0
      %443 = vmatmul.mubr.f32.gmra.mrb[0].mxu0 %v315
      %v444 = vpop.f32.mrb[0].mxu0
      %v445 = vadd.f32 0.0, %v444
      %v446 = vpop.f32.mrb[0].mxu0
      %447 = vmatprep.mubr.f32.mxu0 0.0
      %448 = vmatmul.mubr.f32.gmra.mrb[0].mxu0 %v318
      %v449 = vpop.f32.mrb[0].mxu0
      %v450 = vadd.f32 0.0, %v449
      %v451 = vpop.f32.mrb[0].mxu0
      %452 = vmatprep.mubr.f32.mxu0 0.0
      %453 = vmatmul.mubr.f32.gmra.mrb[0].mxu0 %v321
      %v454 = vpop.f32.mrb[0].mxu0
      %v455 = vadd.f32 0.0, %v454
      %v456 = vpop.f32.mrb[0].mxu0
      %457 = vmatprep.mubr.f32.mxu0 0.0
      %458 = vmatmul.mubr.f32.gmra.mrb[0].mxu0 %v324
      %v459 = vpop.f32.mrb[0].mxu0
      %v460 = vadd.f32 0.0, %v459
      %v461 = vpop.f32.mrb[0].mxu0
      %462 = vmatprep.mubr.f32.mxu0 0.0
      %463 = vmatmul.mubr.f32.gmra.mrb[0].mxu0 %v327
      %v464 = vpop.f32.mrb[0].mxu0
      %v465 = vadd.f32 0.0, %v464
      %v466 = vpop.f32.mrb[0].mxu0
      %467 = vmatprep.mubr.f32.mxu0 0.0
      %468 = vmatmul.mubr.f32.gmra.mrb[0].mxu0 %v330
      %v469 = vpop.f32.mrb[0].mxu0
      %v470 = vadd.f32 0.0, %v469
      %v471 = vpop.f32.mrb[0].mxu0
      %472 = vmatprep.mubr.f32.mxu0 0.0
      %473 = vmatmul.mubr.f32.gmra.mrb[0].mxu0 %v333
      %v474 = vpop.f32.mrb[0].mxu0
      %v475 = vadd.f32 0.0, %v474
      %v476 = vpop.f32.mrb[0].mxu0
      %477 = vmatprep.mubr.f32.mxu0 0.0
      %478 = vmatmul.mubr.f32.gmra.mrb[0].mxu0 %v336
      %v479 = vpop.f32.mrb[0].mxu0
      %v480 = vadd.f32 0.0, %v479
      %v481 = vpop.f32.mrb[0].mxu0
      %482 = vdwg.mxu0
      %vm483 = vcmask 64512
      %v484 = vsel %vm483, %v405, 0.0
      %v485 = vsel %vm483, %v410, 0.0
      %v486 = vadd.f32 %v484, %v485
      %v487 = vsel %vm483, %v415, 0.0
      %v488 = vadd.f32 %v486, %v487
      %v489 = vsel %vm483, %v420, 0.0
      %v490 = vadd.f32 %v488, %v489
      %v491 = vsel %vm483, %v425, 0.0
      %v492 = vadd.f32 %v490, %v491
      %v493 = vsel %vm483, %v430, 0.0
      %v494 = vadd.f32 %v492, %v493
      %v495 = vsel %vm483, %v435, 0.0
      %v496 = vadd.f32 %v494, %v495
      %v497 = vsel %vm483, %v440, 0.0
      %v498 = vadd.f32 %v496, %v497
      %v499 = vsel %vm483, %v445, 0.0
      %v500 = vadd.f32 %v498, %v499
      %v501 = vsel %vm483, %v450, 0.0
      %v502 = vadd.f32 %v500, %v501
      %v503 = vsel %vm483, %v455, 0.0
      %v504 = vadd.f32 %v502, %v503
      %v505 = vsel %vm483, %v460, 0.0
      %v506 = vadd.f32 %v504, %v505
      %v507 = vsel %vm483, %v465, 0.0
      %v508 = vadd.f32 %v506, %v507
      %v509 = vsel %vm483, %v470, 0.0
      %v510 = vadd.f32 %v508, %v509
      %v511 = vsel %vm483, %v475, 0.0
      %v512 = vadd.f32 %v510, %v511
      %v513 = vsel %vm483, %v480, 0.0
      %v514 = vadd.f32 %v512, %v513
      %v515 = vrot.slane %v514, 4
      %v516 = vadd.f32 %v514, %v515
      %v517 = vrot.slane %v516, 2
      %v518 = vadd.f32 %v516, %v517
      %v519 = vrot.slane %v518, 1
      %v520 = vadd.f32 %v518, %v519
      %vm521 = vcmask 57344
      %522 = vst.msk [vmem:[%s258] sm:$0x1] %vm521, %v520
      %v523 = vmul.f32 %v405, %v405
      %v524 = vmul.f32 %v410, %v410
      %v525 = vmul.f32 %v415, %v415
      %v526 = vmul.f32 %v420, %v420
      %v527 = vmul.f32 %v425, %v425
      %v528 = vmul.f32 %v430, %v430
      %v529 = vmul.f32 %v435, %v435
      %v530 = vmul.f32 %v440, %v440
      %v531 = vmul.f32 %v445, %v445
      %v532 = vmul.f32 %v450, %v450
      %v533 = vmul.f32 %v455, %v455
      %v534 = vmul.f32 %v460, %v460
      %v535 = vmul.f32 %v465, %v465
      %v536 = vmul.f32 %v470, %v470
      %v537 = vmul.f32 %v475, %v475
      %v538 = vmul.f32 %v480, %v480
      %v539 = vsel %vm483, %v523, 0.0
      %v540 = vsel %vm483, %v524, 0.0
      %v541 = vadd.f32 %v539, %v540
      %v542 = vsel %vm483, %v525, 0.0
      %v543 = vadd.f32 %v541, %v542
      %v544 = vsel %vm483, %v526, 0.0
      %v545 = vadd.f32 %v543, %v544
      %v546 = vsel %vm483, %v527, 0.0
      %v547 = vadd.f32 %v545, %v546
      %v548 = vsel %vm483, %v528, 0.0
      %v549 = vadd.f32 %v547, %v548
      %v550 = vsel %vm483, %v529, 0.0
      %v551 = vadd.f32 %v549, %v550
      %v552 = vsel %vm483, %v530, 0.0
      %v553 = vadd.f32 %v551, %v552
      %v554 = vsel %vm483, %v531, 0.0
      %v555 = vadd.f32 %v553, %v554
      %v556 = vsel %vm483, %v532, 0.0
      %v557 = vadd.f32 %v555, %v556
      %v558 = vsel %vm483, %v533, 0.0
      %v559 = vadd.f32 %v557, %v558
      %v560 = vsel %vm483, %v534, 0.0
      %v561 = vadd.f32 %v559, %v560
      %v562 = vsel %vm483, %v535, 0.0
      %v563 = vadd.f32 %v561, %v562
      %v564 = vsel %vm483, %v536, 0.0
      %v565 = vadd.f32 %v563, %v564
      %v566 = vsel %vm483, %v537, 0.0
      %v567 = vadd.f32 %v565, %v566
      %v568 = vsel %vm483, %v538, 0.0
      %v569 = vadd.f32 %v567, %v568
      %v570 = vrot.slane %v569, 4
      %v571 = vadd.f32 %v569, %v570
      %v572 = vrot.slane %v571, 2
      %v573 = vadd.f32 %v571, %v572
      %v574 = vrot.slane %v573, 1
      %v575 = vadd.f32 %v573, %v574
      %576 = vst.msk [vmem:[%s264] sm:$0x1] %vm521, %v575
      %577 = vxpose.xlu0.b32.start [1/16] %v405, 128
      %578 = vxpose.xlu0.b32.cont [2/16] %v410, 128
      %579 = vxpose.xlu0.b32.cont [3/16] %v415, 128
      %580 = vxpose.xlu0.b32.cont [4/16] %v420, 128
      %581 = vxpose.xlu0.b32.cont [5/16] %v425, 128
      %582 = vxpose.xlu0.b32.cont [6/16] %v430, 128
      %583 = vxpose.xlu0.b32.cont [7/16] %v435, 128
      %584 = vxpose.xlu0.b32.cont [8/16] %v440, 128
      %585 = vxpose.xlu0.b32.cont [9/16] %v445, 128
      %586 = vxpose.xlu0.b32.cont [10/16] %v450, 128
      %587 = vxpose.xlu0.b32.cont [11/16] %v455, 128
      %588 = vxpose.xlu0.b32.cont [12/16] %v460, 128
      %589 = vxpose.xlu0.b32.cont [13/16] %v465, 128
      %590 = vxpose.xlu0.b32.cont [14/16] %v470, 128
      %591 = vxpose.xlu0.b32.cont [15/16] %v475, 128
      %592 = vxpose.xlu0.b32.end [16/16] %v480, 128
      %v593 = vpop.trf.xlu0
      %v594 = vpop.trf.xlu0
      %v595 = vpop.trf.xlu0
      %v596 = vpop.trf.xlu0
      %v597 = vpop.trf.xlu0
      %v598 = vpop.trf.xlu0
      %v599 = vpop.trf.xlu0
      %v600 = vpop.trf.xlu0
      %v601 = vpop.trf.xlu0
      %v602 = vpop.trf.xlu0
      %v603 = vpop.trf.xlu0
      %v604 = vpop.trf.xlu0
      %v605 = vpop.trf.xlu0
      %v606 = vpop.trf.xlu0
      %v607 = vpop.trf.xlu0
      %v608 = vpop.trf.xlu0
      %609 = vst [vmem:[%s252] sm:$0xff] %v593
      %p610 = scmp.lt.s32.totalorder %s20, 1
      %s611 = scalar_select %p610, %s20, 1
      %p612 = scmp.lt.s32.totalorder %s21, 0
      %s613 = scalar_select %p612, %s21, 0
      %s614 = sadd.s32 %s613, %s611
      %s615 = smul.addr %s614, 8
      %s616 = scalar_lea.vmem %s2, %s615
      %p617 = scmp.lt.s32.totalorder %s20, 1
      %s618 = scalar_select %p617, %s20, 1
      %p619 = scmp.lt.s32.totalorder %s21, 0
      %s620 = scalar_select %p619, %s21, 0
      %s621 = sadd.s32 %s620, %s618
      %s622 = scalar_lea.vmem %s3, %s621
      %p623 = scmp.lt.s32.totalorder %s20, 1
      %s624 = scalar_select %p623, %s20, 1
      %p625 = scmp.lt.s32.totalorder %s21, 0
      %s626 = scalar_select %p625, %s21, 0
      %s627 = sadd.s32 %s626, %s624
      %s628 = scalar_lea.vmem %s4, %s627
      // Predicated region
      $region29: #{downblock_forward.2} parent=27 // pred_check
        %p629 = pneg %p97
      $region30: #{downblock_forward.2} parent=27 // pred_check_branch
        %631 = sbr.rel (%p629) target = $region32
      $region31: #{downblock_forward.2} parent=27 // pred_region
        _
      $region32: #{downblock_forward.2} parent=27 // pred_fallthru
        _
      // Predicated region
      $region33: #{downblock_forward.2} parent=27 // pred_check
        %p632 = pneg %p125
      $region34: #{downblock_forward.2} parent=27 // pred_check_branch
        %634 = sbr.rel (%p632) target = $region36
      $region35: #{downblock_forward.2} parent=27 // pred_region
        _
      $region36: #{downblock_forward.2} parent=27 // pred_fallthru
        _
      // Predicated region
      $region37: #{downblock_forward.2} parent=27 // pred_check
        %p635 = pneg %p153
      $region38: #{downblock_forward.2} parent=27 // pred_check_branch
        %637 = sbr.rel (%p635) target = $region40
      $region39: #{downblock_forward.2} parent=27 // pred_region
        _
      $region40: #{downblock_forward.2} parent=27 // pred_fallthru
        _
    $region28: #{downblock_forward.2} parent=5 // pred_fallthru
      _
    %p638 = scmp.le.s32.totalorder 2, %s11
    // Predicated region
    $region41: #{downblock_forward.2} parent=5 // pred_check
      %p639 = pneg %p638
    $region42: #{downblock_forward.2} parent=5 // pred_check_branch
      %641 = sbr.rel (%p639) target = $region44
    $region43: #{downblock_forward.2} parent=5 // pred_region
      %s642 = ssub.s32 %s11, 2
      // Predicated region
      $region45: #{downblock_forward.2} parent=43 // pred_check
        %p643 = pneg %p103
      $region46: #{downblock_forward.2} parent=43 // pred_check_branch
        %645 = sbr.rel (%p643) target = $region48
      $region47: #{downblock_forward.2} parent=43 // pred_region
        %p646 = scmp.lt.s32.totalorder %s22, 1
        %s647 = scalar_select %p646, %s22, 1
        %p648 = scmp.lt.s32.totalorder %s23, 0
        %s649 = scalar_select %p648, %s23, 0
        %s650 = sadd.s32 %s649, %s647
        %s651 = smul.addr %s650, 8
        %s652 = scalar_lea.vmem %s2, %s651
      $region48: #{downblock_forward.2} parent=43 // pred_fallthru
        _
      // Predicated region
      $region49: #{downblock_forward.2} parent=43 // pred_check
        %p653 = pneg %p131
      $region50: #{downblock_forward.2} parent=43 // pred_check_branch
        %655 = sbr.rel (%p653) target = $region52
      $region51: #{downblock_forward.2} parent=43 // pred_region
        %p656 = scmp.lt.s32.totalorder %s22, 1
        %s657 = scalar_select %p656, %s22, 1
        %p658 = scmp.lt.s32.totalorder %s23, 0
        %s659 = scalar_select %p658, %s23, 0
        %s660 = sadd.s32 %s659, %s657
        %s661 = scalar_lea.vmem %s3, %s660
      $region52: #{downblock_forward.2} parent=43 // pred_fallthru
        _
      // Predicated region
      $region53: #{downblock_forward.2} parent=43 // pred_check
        %p662 = pneg %p159
      $region54: #{downblock_forward.2} parent=43 // pred_check_branch
        %664 = sbr.rel (%p662) target = $region56
      $region55: #{downblock_forward.2} parent=43 // pred_region
        %p665 = scmp.lt.s32.totalorder %s22, 1
        %s666 = scalar_select %p665, %s22, 1
        %p667 = scmp.lt.s32.totalorder %s23, 0
        %s668 = scalar_select %p667, %s23, 0
        %s669 = sadd.s32 %s668, %s666
        %s670 = scalar_lea.vmem %s4, %s669
      $region56: #{downblock_forward.2} parent=43 // pred_fallthru
        _
    $region44: #{downblock_forward.2} parent=5 // pred_fallthru
      _
  $region6: #{downblock_forward.2} parent=0 // loop_footer
    %s15 = sadd.s32 1, %s11
  $region7: #{downblock_forward.2} parent=0 // loop_footer_branch
    %10 = sbr.rel target = $region3
  $region8: #{downblock_forward.2} parent=0 // loop_exit
    _

</llo_original>
